<compile_context>
chip_gen: v7x
topology: tpu7x:2x2x1
jax: 0.10.0
libtpu: 0.0.40
codegen_flags: <defaults>
</compile_context>

<pallas_src>
import functools

import jax
import jax.numpy as jnp
from jax.experimental import pallas as pl
from jax.experimental.pallas import tpu as pltpu


def _rmsnorm_kernel(x_ref, w_ref, o_ref, *, eps, inv_h):
    # x_ref: (tile_rows, H) input dtype; w_ref: (1, H) f32; o_ref: (tile_rows, H).
    x = x_ref[...].astype(jnp.float32)                         # single f32 promotion
    variance = jnp.sum(x * x, axis=-1, keepdims=True) * inv_h  # mean folded into 1/H mul
    y = x * jax.lax.rsqrt(variance + eps)                      # EUP rsqrt, f32 (torch promotion)
    o_ref[...] = (w_ref[...] * y).astype(o_ref.dtype)          # one cast at the very end


def _vmem_params():
    """Generation-aware (tile_budget_bytes, vmem_limit_bytes)."""
    cap = None
    try:
        cap = getattr(pltpu.get_tpu_info(), "vmem_capacity_bytes", None)
    except Exception:  # query unavailable (e.g. interpret mode)
        cap = None
    if not cap:
        cap = 64 << 20  # conservative default: v7x-class 64 MiB physical VMEM
    # Leave headroom below physical VMEM for compiler internal scratch, cap at 96 MiB.
    limit = max(32 << 20, min(int(cap) - (16 << 20), 96 << 20))
    # Budget for the BlockSpec tiles (the accounting in _choose_tile_rows already
    # includes the f32 promotion temps, so 60% of the scoped limit is safe).
    return int(limit * 0.6), limit


def _choose_tile_rows(R, H, dtype, budget_bytes):
    """Largest pack-aligned row tile that (a) fits the VMEM budget including the
    in-kernel f32 temporaries, (b) targets ~4 MiB of input per tile, and
    (c) keeps the step count even for v7x's two TensorCores."""
    itemsize = jnp.dtype(dtype).itemsize
    pack = max(8, 32 // itemsize)                  # 8 f32 / 16 bf16 / 32 int8 sublanes
    # Per row: double-buffered input + output tiles PLUS the f32 promotion
    # temporaries (x_f32, y, ...) that stay live across the lane reduction.
    bytes_per_row = 4 * H * itemsize + 12 * H
    vmem_rows = max(pack, budget_bytes // max(bytes_per_row, 1))
    # Byte-based target instead of a fixed row cap: ~4 MiB of input per tile.
    target_rows = max(pack, (4 << 20) // max(H * itemsize, 1))
    tile = min(vmem_rows, target_rows)
    tile = max(pack, (tile // pack) * pack)
    # Never larger than the pack-rounded-up row count.
    tile = min(tile, max(pack, -(-R // pack) * pack))
    # v7x megacore: nudge the step count even so neither core idles on the
    # final step (harmless on the single-TC v5e/v6e).
    steps = -(-R // tile)
    if steps > 1 and steps % 2 == 1:
        alt_rows = -(-R // (steps + 1))
        alt = max(pack, -(-alt_rows // pack) * pack)
        if alt < tile and (-(-R // alt)) % 2 == 0:
            tile = alt
    return int(tile)


def _row_tile_spec(tile_rows, H, triple_buffer):
    index_map = lambda i: (i, 0)
    if triple_buffer and hasattr(pl, "Buffered"):
        try:
            return pl.BlockSpec((tile_rows, H), index_map, pipeline_mode=pl.Buffered(3))
        except TypeError:  # older BlockSpec signature — fall back to default 2-deep
            pass
    return pl.BlockSpec((tile_rows, H), index_map)


def omni_llama_rmsnorm(hidden_states, weight, eps=1e-6, *, tile_rows=None):
    """RMSNorm over the last dim. hidden_states: (..., H), weight: (H,)."""
    orig_shape = hidden_states.shape
    H = orig_shape[-1]
    x2d = hidden_states.reshape(-1, H)
    R = x2d.shape[0]
    itemsize = jnp.dtype(hidden_states.dtype).itemsize

    tile_budget, vmem_limit = _vmem_params()
    if tile_rows is None:
        tile_rows = _choose_tile_rows(R, H, hidden_states.dtype, tile_budget)
    num_tiles = pl.cdiv(R, tile_rows)   # partial final block handled by Pallas

    # Loop-invariant weight, pre-cast to f32 once (matches torch's promotion
    # of `weight * f32_hidden_states`).
    w2d = weight.astype(jnp.float32).reshape(1, H)

    kernel = functools.partial(_rmsnorm_kernel, eps=eps, inv_h=1.0 / H)

    # Triple-buffer the input only in the tiny-tile regime, where per-tile DMA
    # time is comparable to the fixed per-step overhead.
    triple = (num_tiles >= 4) and (tile_rows * H * itemsize < (1 << 20))
    x_spec = _row_tile_spec(tile_rows, H, triple)

    cost = pl.CostEstimate(
        flops=int(4 * R * H),
        transcendentals=int(R),
        bytes_accessed=int(2 * R * H * itemsize + 4 * H),
    )

    out = pl.pallas_call(
        kernel,
        out_shape=jax.ShapeDtypeStruct((R, H), hidden_states.dtype),
        grid_spec=pltpu.PrefetchScalarGridSpec(
            num_scalar_prefetch=0,
            grid=(num_tiles,),
            in_specs=[
                x_spec,
                pl.BlockSpec((1, H), lambda i: (0, 0)),
            ],
            out_specs=pl.BlockSpec((tile_rows, H), lambda i: (i, 0)),
        ),
        compiler_params=pltpu.CompilerParams(
            dimension_semantics=("parallel",),
            vmem_limit_bytes=vmem_limit,
        ),
        cost_estimate=cost,
    )(x2d, w2d)

    return out.reshape(orig_shape)


def _reference_rmsnorm(x, weight, eps=1e-6):
    input_dtype = x.dtype
    x_f32 = x.astype(jnp.float32)
    variance = jnp.mean(x_f32 * x_f32, axis=-1, keepdims=True)
    y = x_f32 * jax.lax.rsqrt(variance + eps)
    return (weight.astype(jnp.float32) * y).astype(input_dtype)


if __name__ == "__main__":
    key = jax.random.PRNGKey(0)
    kx, kw, kx2 = jax.random.split(key, 3)

    # Case 1: f32, rows tile evenly.
    batch, seq, hidden = 2, 8, 128
    hidden_states = jax.random.normal(kx, (batch, seq, hidden), dtype=jnp.float32)
    # Llama RMSNorm weights init to ones; add a small deterministic jitter so
    # the weight multiply is non-trivial.
    weight = jnp.ones((hidden,), dtype=jnp.float32) + 0.01 * jax.random.normal(
        kw, (hidden,), dtype=jnp.float32
    )
    out = jax.block_until_ready(omni_llama_rmsnorm(hidden_states, weight, eps=1e-6))
    ref = _reference_rmsnorm(hidden_states, weight, eps=1e-6)
    assert out.shape == hidden_states.shape and out.dtype == hidden_states.dtype
    assert jnp.allclose(out, ref, atol=1e-5, rtol=1e-5)

    # Case 2: bf16, ragged rows (15) -> one partial block, no pad / no slice.
    hs_bf16 = jax.random.normal(kx2, (3, 5, hidden), dtype=jnp.float32).astype(
        jnp.bfloat16
    )
    out2 = jax.block_until_ready(omni_llama_rmsnorm(hs_bf16, weight, eps=1e-6))
    ref2 = _reference_rmsnorm(hs_bf16, weight, eps=1e-6)
    assert out2.shape == hs_bf16.shape and out2.dtype == jnp.bfloat16
    assert jnp.allclose(
        out2.astype(jnp.float32), ref2.astype(jnp.float32), atol=2e-2, rtol=2e-2
    )

    # Case 3: f32, ragged rows with an explicit small tile -> multi-step grid
    # whose final block is partial (exercises the masked-writeback path).
    hs3 = jax.random.normal(kx, (3, 5, hidden), dtype=jnp.float32)
    out3 = jax.block_until_ready(omni_llama_rmsnorm(hs3, weight, eps=1e-6, tile_rows=8))
    ref3 = _reference_rmsnorm(hs3, weight, eps=1e-6)
    assert out3.shape == hs3.shape
    assert jnp.allclose(out3, ref3, atol=1e-5, rtol=1e-5)

    print("KERNEL_OK")
</pallas_src>

<mosaic_0001>
module attributes {stable_mosaic.version = 11 : i64} {
  func.func @_rmsnorm_kernel(%arg0: i32, %arg1: memref<16x128xf32, #tpu.memory_space<vmem>>, %arg2: memref<1x128xf32, #tpu.memory_space<vmem>>, %arg3: memref<16x128xf32, #tpu.memory_space<vmem>>) attributes {dimension_semantics = [#tpu.dimension_semantics<parallel>], iteration_bounds = array<i64: 1>, scalar_prefetch = 0 : i64, scratch_operands = 0 : i64, tpu.core_type = #tpu.core_type<tc>, window_params = [{transform_indices = @transform_0, window_bounds = array<i64: 16, 128>}, {pipeline_mode = #tpu.pipeline_mode<synchronous>, transform_indices = @transform_1, window_bounds = array<i64: 1, 128>}, {transform_indices = @transform_2, window_bounds = array<i64: 16, 128>}]} {
    %c0 = arith.constant 0 : index
    %c0_0 = arith.constant 0 : index
    %0 = vector.load %arg1[%c0, %c0_0] : memref<16x128xf32, #tpu.memory_space<vmem>>, vector<16x128xf32>
    %1 = arith.mulf %0, %0 : vector<16x128xf32>
    %cst = arith.constant dense<0.000000e+00> : vector<16xf32>
    %2 = vector.multi_reduction <add>, %1, %cst [1] : vector<16x128xf32> to vector<16xf32>
    %3 = vector.shape_cast %2 : vector<16xf32> to vector<16x1xf32>
    %cst_1 = arith.constant 7.812500e-03 : f32
    %4 = vector.broadcast %cst_1 : f32 to vector<16x1xf32>
    %5 = arith.mulf %3, %4 : vector<16x1xf32>
    %cst_2 = arith.constant 9.99999997E-7 : f32
    %6 = vector.broadcast %cst_2 : f32 to vector<16x1xf32>
    %7 = arith.addf %5, %6 : vector<16x1xf32>
    %8 = math.rsqrt %7 : vector<16x1xf32>
    %9 = vector.broadcast %8 : vector<16x1xf32> to vector<16x128xf32>
    %10 = arith.mulf %0, %9 : vector<16x128xf32>
    %c0_3 = arith.constant 0 : index
    %c0_4 = arith.constant 0 : index
    %11 = vector.load %arg2[%c0_3, %c0_4] : memref<1x128xf32, #tpu.memory_space<vmem>>, vector<1x128xf32>
    %12 = vector.broadcast %11 : vector<1x128xf32> to vector<16x128xf32>
    %13 = arith.mulf %12, %10 : vector<16x128xf32>
    %c0_5 = arith.constant 0 : index
    %c0_6 = arith.constant 0 : index
    %14 = vector.load %arg3[%c0_5, %c0_6] : memref<16x128xf32, #tpu.memory_space<vmem>>, vector<16x128xf32>
    tpu.vector_store %arg3[%c0_5, %c0_6], %13 {strides = array<i32>} : memref<16x128xf32, #tpu.memory_space<vmem>>, vector<16x128xf32>,
    return
  }
  func.func @transform_0(%arg0: i32) -> (i32, i32) {
    %c0_i32 = arith.constant 0 : i32
    %c0_i32_0 = arith.constant 0 : i32
    return %arg0, %c0_i32 : i32, i32
  }
  func.func @transform_1(%arg0: i32) -> (i32, i32) {
    %c0_i32 = arith.constant 0 : i32
    %c0_i32_0 = arith.constant 0 : i32
    %c0_i32_1 = arith.constant 0 : i32
    return %c0_i32, %c0_i32_0 : i32, i32
  }
  func.func @transform_2(%arg0: i32) -> (i32, i32) {
    %c0_i32 = arith.constant 0 : i32
    %c0_i32_0 = arith.constant 0 : i32
    return %arg0, %c0_i32 : i32, i32
  }
}

</mosaic_0001>

<llo_original>
// kernel: tpu_custom_call.1
$region0: #{tpu_custom_call.1}
  #allocation0 [shape = 'u32[]', space=smem, size = 0x4, offset = 0x4, fixed_abs, tag = 'smem constant byte address 0x4 - core index']
  #allocation1 [shape = 'u32[144,128]{1,0:T(1,128)}', space=vmem, size = 0x12000, scoped, tag = 'internal scratch']
  %s0 = inlined_call_operand.hbm [shape: f32[16,128], index: 0, kind: input, shape index: {}]
  %s1 = inlined_call_operand.vmem [shape: f32[1,128], index: 1, kind: input, shape index: {}]
  %s2 = inlined_call_operand.hbm [shape: f32[16,128], index: 2, kind: output, shape index: {}]
  %s3 = sld [smem:[#allocation0]]
  $region22: #{tpu_custom_call.1} parent=0
    _
  %s5 = ssub.s32 1, %s3
  %s6 = scalar_select 0, %s5, %s3
  $region1: #{tpu_custom_call.1} parent=0
    #allocation2 [shape = 'u8[8192]{0}', space=vmem, size = 0x2000, scoped, tag = 'input window, operand 0, single buffered']
    #allocation3 [shape = 's32[1]{0}', space=sflag, size = 0x4, scoped, tag = 'scoped memory for tpu_custom_call.1']
    #allocation4 [shape = 's32[1]{0}', space=sflag, size = 0x4, scoped, tag = 'scoped memory for tpu_custom_call.1']
    #allocation5 [shape = 'u8[8192]{0}', space=vmem, size = 0x2000, scoped, tag = 'output window, operand 0, single buffered']
    %7 = vsyncpa [#allocation3], 0
    %8 = vsyncpa [#allocation4], 0
    // Predicated region
    $region2: #{tpu_custom_call.1} parent=1 // pred_check
      _
    $region3: #{tpu_custom_call.1} parent=1 // pred_check_branch
      %10 = sbr.rel (0) target = $region5
    $region4: #{tpu_custom_call.1} parent=1 // pred_region
      %s12 = ssub.s32 256, 256
      %13 = vsyncadd [#allocation3], %s12
      %s14 = sshll.u32 [#allocation2], 4
      %s15 = int_to_ptr.vmem [resolvable:$true] %s14
      %20 = dma.hbm_to_vmem [thread:$0]  %s0, 256, %s15, [#allocation3], 128, 128, 8
    $region5: #{tpu_custom_call.1} parent=1 // pred_fallthru
      _
    // Predicated region
    $region6: #{tpu_custom_call.1} parent=1 // pred_check
      _
    $region7: #{tpu_custom_call.1} parent=1 // pred_check_branch
      %22 = sbr.rel (0) target = $region9
    $region8: #{tpu_custom_call.1} parent=1 // pred_region
      _
    $region9: #{tpu_custom_call.1} parent=1 // pred_fallthru
      _
    // Predicated region
    $region10: #{tpu_custom_call.1} parent=1 // pred_check
      _
    $region11: #{tpu_custom_call.1} parent=1 // pred_check_branch
      %24 = sbr.rel (0) target = $region13
    $region12: #{tpu_custom_call.1} parent=1 // pred_region
      %25 = dma.done [#allocation3], 256
    $region13: #{tpu_custom_call.1} parent=1 // pred_fallthru
      _
    %v26 = vld [vmem:[#allocation2] sm:$0xff]
    %v27 = vld [vmem:[#allocation2 + $0x8] sm:$0xff]
    %v28 = vmul.f32 %v26, %v26
    %v29 = vmul.f32 %v27, %v27
    %30 = vadd.xlane.f32.xlu0 %v28
    %v31 = vpop.xlane.xlu0 %30
    %32 = vadd.xlane.f32.xlu0 %v29
    %v33 = vpop.xlane.xlu0 %32
    %v34 = vmul.f32 %v31, 0.0078125
    %v35 = vmul.f32 %v33, 0.0078125
    %v36 = vadd.f32 %v34, 1e-06
    %v37 = vadd.f32 %v35, 1e-06
    %v38 = vrsqrt.pop %v36
    %v39 = vrsqrt.pop %v37
    %v40 = vmul.f32 %v26, %v38
    %v41 = vmul.f32 %v27, %v39
    %v42 = vld [vmem:[%s1] sm:$0x1]
    %v44 = vlaneseq
    %v45 = vshrl.u32 %v44, 7
    %v46 = vsub.s32 0, %v45
    %v47 = vrot.slane %v42, %v46
    %v49 = vmul.f32 %v47, %v40
    %v50 = vmul.f32 %v47, %v41
    %51 = vst [vmem:[#allocation5] sm:$0xff] %v49
    %52 = vst [vmem:[#allocation5 + $0x8] sm:$0xff] %v50
    // Predicated region
    $region14: #{tpu_custom_call.1} parent=1 // pred_check
      _
    $region15: #{tpu_custom_call.1} parent=1 // pred_check_branch
      %54 = sbr.rel (0) target = $region17
    $region16: #{tpu_custom_call.1} parent=1 // pred_region
      %s56 = ssub.s32 256, 256
      %57 = vsyncadd [#allocation4], %s56
      %s58 = sshll.u32 [#allocation5], 4
      %s59 = int_to_ptr.vmem [resolvable:$true] %s58
      %64 = dma.vmem_to_hbm [thread:$0]  %s59, 256, %s2, [#allocation4], 128, 128, 8
    $region17: #{tpu_custom_call.1} parent=1 // pred_fallthru
      _
    // Predicated region
    $region18: #{tpu_custom_call.1} parent=1 // pred_check
      _
    $region19: #{tpu_custom_call.1} parent=1 // pred_check_branch
      %66 = sbr.rel (0) target = $region21
    $region20: #{tpu_custom_call.1} parent=1 // pred_region
      %67 = dma.done [#allocation4], 256
    $region21: #{tpu_custom_call.1} parent=1 // pred_fallthru
      _
    %68 = vsyncpa [#allocation3], 1
    %69 = vsyncpa [#allocation4], 1

</llo_original>
